<compile_context>
chip_gen: v6e
topology: v6e:2x2x1
jax: 0.10.0
libtpu: 0.0.40
codegen_flags: <defaults>
</compile_context>

<pallas_src>
import jax
import jax.numpy as jnp
from jax.experimental import pallas as pl
from jax.experimental.pallas import tpu as pltpu


# ----------------------------------------------------------------------------
# Kernel
# ----------------------------------------------------------------------------
def _make_td3_value_kernel(n_hidden):
    """Build a fused kernel for `n_hidden` hidden layers.

    Ref order: state, action, w1_state, w1_action, b1,
               [w_i, b_i] for each extra hidden layer (block-diagonal packed),
               w_head, b_head, out.
    """

    def kernel(s_ref, a_ref, *refs):
        out_ref = refs[-1]
        w1s_ref, w1a_ref, b1_ref = refs[0], refs[1], refs[2]

        # Layer 1 (both Q-nets stacked along the output axis); the concat of
        # [state, action] is folded into two matmuls on the split weight.
        h = jnp.dot(s_ref[...], w1s_ref[...], preferred_element_type=jnp.float32)
        h = h + jnp.dot(a_ref[...], w1a_ref[...], preferred_element_type=jnp.float32)
        h = jnp.maximum(h + b1_ref[...], 0.0)

        # Deeper hidden layers: block-diagonal packed weights keep the two
        # Q-branches independent while using a single MXU pass per layer.
        idx = 3
        for _ in range(n_hidden - 1):
            w_ref, b_ref = refs[idx], refs[idx + 1]
            idx += 2
            h = jnp.maximum(
                jnp.dot(h, w_ref[...], preferred_element_type=jnp.float32) + b_ref[...],
                0.0,
            )

        # Heads packed into a single (2H, 2) weight -> lane-packed (B, 2) out.
        wh_ref, bh_ref = refs[idx], refs[idx + 1]
        q = jnp.dot(h, wh_ref[...], preferred_element_type=jnp.float32) + bh_ref[...]
        out_ref[...] = q.astype(out_ref.dtype)

    return kernel


# ----------------------------------------------------------------------------
# Parameter packing (one-time, outside the kernel)
# ----------------------------------------------------------------------------
def pack_params(params, state_dim, hidden_layers_dim):
    """Pack per-branch (in, out) weights into the fused layout used by the kernel."""
    H = list(hidden_layers_dim)
    packed = []

    # Layer 1: split rows by state/action, stack the two branches along columns.
    w1_q1, w1_q2 = params["q1_w1"], params["q2_w1"]
    w1s = jnp.concatenate([w1_q1[:state_dim], w1_q2[:state_dim]], axis=1)
    w1a = jnp.concatenate([w1_q1[state_dim:], w1_q2[state_dim:]], axis=1)
    b1 = jnp.concatenate([params["q1_b1"], params["q2_b1"]], axis=1)
    packed += [w1s, w1a, b1]

    # Remaining hidden layers: block-diagonal (zeros off-diagonal keep branches independent).
    for i in range(1, len(H)):
        wq1, wq2 = params[f"q1_w{i + 1}"], params[f"q2_w{i + 1}"]
        d_in, d_out = wq1.shape
        w = jnp.zeros((2 * d_in, 2 * d_out), jnp.float32)
        w = w.at[:d_in, :d_out].set(wq1).at[d_in:, d_out:].set(wq2)
        b = jnp.concatenate([params[f"q1_b{i + 1}"], params[f"q2_b{i + 1}"]], axis=1)
        packed += [w, b]

    # Heads: (2H, 2) with q1 head in column 0 / top block, q2 head in column 1 / bottom block.
    d = H[-1]
    wh = jnp.zeros((2 * d, 2), jnp.float32)
    wh = wh.at[:d, 0:1].set(params["q1_wh"]).at[d:, 1:2].set(params["q2_wh"])
    bh = jnp.concatenate([params["q1_bh"], params["q2_bh"]], axis=1)
    packed += [wh, bh]
    return packed


# ----------------------------------------------------------------------------
# Wrapper
# ----------------------------------------------------------------------------
def td3_value_forward(state, action, params, hidden_layers_dim, *, batch_tile=1024):
    """Fused TD3 twin-Q forward. Returns (q1, q2), each (B, 1)."""
    state = state.astype(jnp.float32)
    action = action.astype(jnp.float32)
    batch = state.shape[0]
    state_dim = state.shape[1]
    action_dim = action.shape[1]

    # Packing is cheap (tiny weights); under jit with constant params XLA folds it.
    packed = pack_params(params, state_dim, hidden_layers_dim)

    # Choose batch tile; pad to a multiple of the tile only when gridding.
    if batch <= batch_tile:
        tb, pad = batch, 0
    else:
        tb = batch_tile
        pad = (-batch) % tb
        if pad:
            state = jnp.pad(state, ((0, pad), (0, 0)))
            action = jnp.pad(action, ((0, pad), (0, 0)))
    padded_batch = batch + pad
    grid = (padded_batch // tb,)

    kernel = _make_td3_value_kernel(len(hidden_layers_dim))

    in_specs = [
        pl.BlockSpec((tb, state_dim), lambda i: (i, 0)),
        pl.BlockSpec((tb, action_dim), lambda i: (i, 0)),
    ]
    # Weights / biases: full-array blocks with constant index_map -> VMEM-resident.
    for p in packed:
        in_specs.append(pl.BlockSpec(p.shape, lambda i: (0, 0)))

    out_specs = pl.BlockSpec((tb, 2), lambda i: (i, 0))
    out_shape = jax.ShapeDtypeStruct((padded_batch, 2), jnp.float32)

    # Advisory cost estimate for the XLA scheduler.
    sa_dim = state_dim + action_dim
    widths = [2 * h for h in hidden_layers_dim]
    flops = 2 * padded_batch * (
        sa_dim * widths[0]
        + sum(widths[i - 1] * widths[i] for i in range(1, len(widths)))
        + widths[-1] * 2
    )
    bytes_accessed = 4 * (
        padded_batch * (sa_dim + 2) + sum(int(p.size) for p in packed)
    )

    out = pl.pallas_call(
        kernel,
        out_shape=out_shape,
        grid=grid,
        in_specs=in_specs,
        out_specs=out_specs,
        compiler_params=pltpu.CompilerParams(
            dimension_semantics=("parallel",),
        ),
        cost_estimate=pl.CostEstimate(
            flops=flops, transcendentals=0, bytes_accessed=bytes_accessed
        ),
    )(state, action, *packed)

    out = out[:batch]
    return out[:, 0:1], out[:, 1:2]


# ----------------------------------------------------------------------------
# Init (PyTorch-style) & pure-JAX reference
# ----------------------------------------------------------------------------
def init_params(key, state_dim, action_dim, hidden_layers_dim):
    """PyTorch-style init: U(-1/sqrt(fan_in), 1/sqrt(fan_in)).

    Weights stored pre-transposed as (in, out); biases as (1, out).
    """
    # TODO(synk): state_feature_share=True path (128-d shared state feature) not implemented.
    sa_dim = state_dim + action_dim
    dims = [sa_dim] + list(hidden_layers_dim)

    params = {}
    for branch in ("q1", "q2"):
        for i in range(len(hidden_layers_dim)):
            d_in, d_out = dims[i], dims[i + 1]
            key, kw, kb = jax.random.split(key, 3)
            bound = 1.0 / jnp.sqrt(float(d_in))
            params[f"{branch}_w{i + 1}"] = jax.random.uniform(
                kw, (d_in, d_out), jnp.float32, -bound, bound)
            params[f"{branch}_b{i + 1}"] = jax.random.uniform(
                kb, (1, d_out), jnp.float32, -bound, bound)
        d_in = hidden_layers_dim[-1]
        key, kw, kb = jax.random.split(key, 3)
        bound = 1.0 / jnp.sqrt(float(d_in))
        params[f"{branch}_wh"] = jax.random.uniform(
            kw, (d_in, 1), jnp.float32, -bound, bound)
        params[f"{branch}_bh"] = jax.random.uniform(
            kb, (1, 1), jnp.float32, -bound, bound)
    return params


def reference_forward(state, action, params, hidden_layers_dim):
    """Pure-JAX reference identical to the PyTorch forward."""
    x = jnp.concatenate([state, action], axis=1).astype(jnp.float32)

    def branch(prefix):
        h = x
        for i in range(len(hidden_layers_dim)):
            h = jnp.maximum(h @ params[f"{prefix}_w{i + 1}"] + params[f"{prefix}_b{i + 1}"], 0.0)
        return h @ params[f"{prefix}_wh"] + params[f"{prefix}_bh"]

    return branch("q1"), branch("q2")


if __name__ == "__main__":
    state_dim = 12
    action_dim = 4
    hidden_layers_dim = [32, 32]

    key = jax.random.PRNGKey(0)
    k_params, k_state, k_action = jax.random.split(key, 3)
    params = init_params(k_params, state_dim, action_dim, hidden_layers_dim)

    # Small single-block case (grid = (1,)).
    batch = 8
    state = jax.random.normal(k_state, (batch, state_dim), jnp.float32)
    action = jax.random.normal(k_action, (batch, action_dim), jnp.float32)

    q1, q2 = td3_value_forward(state, action, params, hidden_layers_dim)
    jax.block_until_ready((q1, q2))

    r1, r2 = reference_forward(state, action, params, hidden_layers_dim)
    assert q1.shape == (batch, 1) and q2.shape == (batch, 1)
    assert jnp.allclose(q1, r1, atol=1e-5), "Q1 mismatch (small batch)"
    assert jnp.allclose(q2, r2, atol=1e-5), "Q2 mismatch (small batch)"

    # Larger batch to exercise the batch grid + padding path (tile=256 forces grid > 1).
    k_state2, k_action2 = jax.random.split(jax.random.PRNGKey(1))
    batch2 = 300
    state2 = jax.random.normal(k_state2, (batch2, state_dim), jnp.float32)
    action2 = jax.random.normal(k_action2, (batch2, action_dim), jnp.float32)

    g1, g2 = td3_value_forward(state2, action2, params, hidden_layers_dim, batch_tile=256)
    jax.block_until_ready((g1, g2))
    s1, s2 = reference_forward(state2, action2, params, hidden_layers_dim)
    assert g1.shape == (batch2, 1) and g2.shape == (batch2, 1)
    assert jnp.allclose(g1, s1, atol=1e-5), "Q1 mismatch (gridded batch)"
    assert jnp.allclose(g2, s2, atol=1e-5), "Q2 mismatch (gridded batch)"

    print("KERNEL_OK")
</pallas_src>

<mosaic_0001>
module attributes {stable_mosaic.version = 11 : i64} {
  func.func @kernel(%arg0: i32, %arg1: memref<8x12xf32, #tpu.memory_space<vmem>>, %arg2: memref<8x4xf32, #tpu.memory_space<vmem>>, %arg3: memref<12x64xf32, #tpu.memory_space<vmem>>, %arg4: memref<4x64xf32, #tpu.memory_space<vmem>>, %arg5: memref<1x64xf32, #tpu.memory_space<vmem>>, %arg6: memref<64x64xf32, #tpu.memory_space<vmem>>, %arg7: memref<1x64xf32, #tpu.memory_space<vmem>>, %arg8: memref<64x2xf32, #tpu.memory_space<vmem>>, %arg9: memref<1x2xf32, #tpu.memory_space<vmem>>, %arg10: memref<8x2xf32, #tpu.memory_space<vmem>>) attributes {dimension_semantics = [#tpu.dimension_semantics<parallel>], iteration_bounds = array<i64: 1>, scalar_prefetch = 0 : i64, scratch_operands = 0 : i64, tpu.core_type = #tpu.core_type<tc>, window_params = [{transform_indices = @transform_0, window_bounds = array<i64: 8, 12>}, {transform_indices = @transform_1, window_bounds = array<i64: 8, 4>}, {pipeline_mode = #tpu.pipeline_mode<synchronous>, transform_indices = @transform_2, window_bounds = array<i64: 12, 64>}, {pipeline_mode = #tpu.pipeline_mode<synchronous>, transform_indices = @transform_3, window_bounds = array<i64: 4, 64>}, {pipeline_mode = #tpu.pipeline_mode<synchronous>, transform_indices = @transform_4, window_bounds = array<i64: 1, 64>}, {pipeline_mode = #tpu.pipeline_mode<synchronous>, transform_indices = @transform_5, window_bounds = array<i64: 64, 64>}, {pipeline_mode = #tpu.pipeline_mode<synchronous>, transform_indices = @transform_6, window_bounds = array<i64: 1, 64>}, {pipeline_mode = #tpu.pipeline_mode<synchronous>, transform_indices = @transform_7, window_bounds = array<i64: 64, 2>}, {pipeline_mode = #tpu.pipeline_mode<synchronous>, transform_indices = @transform_8, window_bounds = array<i64: 1, 2>}, {transform_indices = @transform_9, window_bounds = array<i64: 8, 2>}]} {
    %c0 = arith.constant 0 : index
    %c0_0 = arith.constant 0 : index
    %0 = vector.load %arg1[%c0, %c0_0] : memref<8x12xf32, #tpu.memory_space<vmem>>, vector<8x12xf32>
    %c0_1 = arith.constant 0 : index
    %c0_2 = arith.constant 0 : index
    %1 = vector.load %arg3[%c0_1, %c0_2] : memref<12x64xf32, #tpu.memory_space<vmem>>, vector<12x64xf32>
    %cst = arith.constant dense<0.000000e+00> : vector<8x64xf32>
    %2 = tpu.matmul %0, %1, %cst {dimension_numbers = #tpu.dot_dimension_numbers<[1], [0], [0], [1], [0, 0, 1, 1], [], []>} : vector<8x12xf32>, vector<12x64xf32>, vector<8x64xf32> -> vector<8x64xf32>
    %c0_3 = arith.constant 0 : index
    %c0_4 = arith.constant 0 : index
    %3 = vector.load %arg2[%c0_3, %c0_4] : memref<8x4xf32, #tpu.memory_space<vmem>>, vector<8x4xf32>
    %c0_5 = arith.constant 0 : index
    %c0_6 = arith.constant 0 : index
    %4 = vector.load %arg4[%c0_5, %c0_6] : memref<4x64xf32, #tpu.memory_space<vmem>>, vector<4x64xf32>
    %cst_7 = arith.constant dense<0.000000e+00> : vector<8x64xf32>
    %5 = tpu.matmul %3, %4, %cst_7 {dimension_numbers = #tpu.dot_dimension_numbers<[1], [0], [0], [1], [0, 0, 1, 1], [], []>} : vector<8x4xf32>, vector<4x64xf32>, vector<8x64xf32> -> vector<8x64xf32>
    %6 = arith.addf %2, %5 : vector<8x64xf32>
    %c0_8 = arith.constant 0 : index
    %c0_9 = arith.constant 0 : index
    %7 = vector.load %arg5[%c0_8, %c0_9] : memref<1x64xf32, #tpu.memory_space<vmem>>, vector<1x64xf32>
    %8 = vector.broadcast %7 : vector<1x64xf32> to vector<8x64xf32>
    %9 = arith.addf %6, %8 : vector<8x64xf32>
    %cst_10 = arith.constant 0.000000e+00 : f32
    %10 = vector.broadcast %cst_10 : f32 to vector<8x64xf32>
    %11 = arith.maximumf %9, %10 : vector<8x64xf32>
    %c0_11 = arith.constant 0 : index
    %c0_12 = arith.constant 0 : index
    %12 = vector.load %arg6[%c0_11, %c0_12] : memref<64x64xf32, #tpu.memory_space<vmem>>, vector<64x64xf32>
    %cst_13 = arith.constant dense<0.000000e+00> : vector<8x64xf32>
    %13 = tpu.matmul %11, %12, %cst_13 {dimension_numbers = #tpu.dot_dimension_numbers<[1], [0], [0], [1], [0, 0, 1, 1], [], []>} : vector<8x64xf32>, vector<64x64xf32>, vector<8x64xf32> -> vector<8x64xf32>
    %c0_14 = arith.constant 0 : index
    %c0_15 = arith.constant 0 : index
    %14 = vector.load %arg7[%c0_14, %c0_15] : memref<1x64xf32, #tpu.memory_space<vmem>>, vector<1x64xf32>
    %15 = vector.broadcast %14 : vector<1x64xf32> to vector<8x64xf32>
    %16 = arith.addf %13, %15 : vector<8x64xf32>
    %cst_16 = arith.constant 0.000000e+00 : f32
    %17 = vector.broadcast %cst_16 : f32 to vector<8x64xf32>
    %18 = arith.maximumf %16, %17 : vector<8x64xf32>
    %c0_17 = arith.constant 0 : index
    %c0_18 = arith.constant 0 : index
    %19 = vector.load %arg8[%c0_17, %c0_18] : memref<64x2xf32, #tpu.memory_space<vmem>>, vector<64x2xf32>
    %cst_19 = arith.constant dense<0.000000e+00> : vector<8x2xf32>
    %20 = tpu.matmul %18, %19, %cst_19 {dimension_numbers = #tpu.dot_dimension_numbers<[1], [0], [0], [1], [0, 0, 1, 1], [], []>} : vector<8x64xf32>, vector<64x2xf32>, vector<8x2xf32> -> vector<8x2xf32>
    %c0_20 = arith.constant 0 : index
    %c0_21 = arith.constant 0 : index
    %21 = vector.load %arg9[%c0_20, %c0_21] : memref<1x2xf32, #tpu.memory_space<vmem>>, vector<1x2xf32>
    %22 = vector.broadcast %21 : vector<1x2xf32> to vector<8x2xf32>
    %23 = arith.addf %20, %22 : vector<8x2xf32>
    %c0_22 = arith.constant 0 : index
    %c0_23 = arith.constant 0 : index
    %24 = vector.load %arg10[%c0_22, %c0_23] : memref<8x2xf32, #tpu.memory_space<vmem>>, vector<8x2xf32>
    tpu.vector_store %arg10[%c0_22, %c0_23], %23 {strides = array<i32>} : memref<8x2xf32, #tpu.memory_space<vmem>>, vector<8x2xf32>,
    return
  }
  func.func @transform_0(%arg0: i32) -> (i32, i32) {
    %c0_i32 = arith.constant 0 : i32
    %c0_i32_0 = arith.constant 0 : i32
    return %arg0, %c0_i32 : i32, i32
  }
  func.func @transform_1(%arg0: i32) -> (i32, i32) {
    %c0_i32 = arith.constant 0 : i32
    %c0_i32_0 = arith.constant 0 : i32
    return %arg0, %c0_i32 : i32, i32
  }
  func.func @transform_2(%arg0: i32) -> (i32, i32) {
    %c0_i32 = arith.constant 0 : i32
    %c0_i32_0 = arith.constant 0 : i32
    %c0_i32_1 = arith.constant 0 : i32
    return %c0_i32, %c0_i32_0 : i32, i32
  }
  func.func @transform_3(%arg0: i32) -> (i32, i32) {
    %c0_i32 = arith.constant 0 : i32
    %c0_i32_0 = arith.constant 0 : i32
    %c0_i32_1 = arith.constant 0 : i32
    return %c0_i32, %c0_i32_0 : i32, i32
  }
  func.func @transform_4(%arg0: i32) -> (i32, i32) {
    %c0_i32 = arith.constant 0 : i32
    %c0_i32_0 = arith.constant 0 : i32
    %c0_i32_1 = arith.constant 0 : i32
    return %c0_i32, %c0_i32_0 : i32, i32
  }
  func.func @transform_5(%arg0: i32) -> (i32, i32) {
    %c0_i32 = arith.constant 0 : i32
    %c0_i32_0 = arith.constant 0 : i32
    %c0_i32_1 = arith.constant 0 : i32
    return %c0_i32, %c0_i32_0 : i32, i32
  }
  func.func @transform_6(%arg0: i32) -> (i32, i32) {
    %c0_i32 = arith.constant 0 : i32
    %c0_i32_0 = arith.constant 0 : i32
    %c0_i32_1 = arith.constant 0 : i32
    return %c0_i32, %c0_i32_0 : i32, i32
  }
  func.func @transform_7(%arg0: i32) -> (i32, i32) {
    %c0_i32 = arith.constant 0 : i32
    %c0_i32_0 = arith.constant 0 : i32
    %c0_i32_1 = arith.constant 0 : i32
    return %c0_i32, %c0_i32_0 : i32, i32
  }
  func.func @transform_8(%arg0: i32) -> (i32, i32) {
    %c0_i32 = arith.constant 0 : i32
    %c0_i32_0 = arith.constant 0 : i32
    %c0_i32_1 = arith.constant 0 : i32
    return %c0_i32, %c0_i32_0 : i32, i32
  }
  func.func @transform_9(%arg0: i32) -> (i32, i32) {
    %c0_i32 = arith.constant 0 : i32
    %c0_i32_0 = arith.constant 0 : i32
    return %arg0, %c0_i32 : i32, i32
  }
}

</mosaic_0001>

<llo_original>
// kernel: tpu_custom_call.1
$region0: #{tpu_custom_call.1}
  #allocation0 [shape = 'u32[]', space=smem, size = 0x4, offset = 0x4, fixed_abs, tag = 'smem constant byte address 0x4 - core index']
  #allocation1 [shape = 'u32[144,128]{1,0:T(1,128)}', space=vmem, size = 0x12000, scoped, tag = 'internal scratch']
  %s0 = inlined_call_operand.hbm [shape: f32[8,12], index: 0, kind: input, shape index: {}]
  %s1 = inlined_call_operand.vmem [shape: f32[8,4], index: 1, kind: input, shape index: {}]
  %s2 = inlined_call_operand.vmem [shape: f32[12,64], index: 2, kind: input, shape index: {}]
  %s3 = inlined_call_operand.vmem [shape: f32[4,64], index: 3, kind: input, shape index: {}]
  %s4 = inlined_call_operand.vmem [shape: f32[1,64], index: 4, kind: input, shape index: {}]
  %s5 = inlined_call_operand.vmem [shape: f32[64,64], index: 5, kind: input, shape index: {}]
  %s6 = inlined_call_operand.vmem [shape: f32[1,64], index: 6, kind: input, shape index: {}]
  %s7 = inlined_call_operand.vmem [shape: f32[64,2], index: 7, kind: input, shape index: {}]
  %s8 = inlined_call_operand.vmem [shape: f32[1,2], index: 8, kind: input, shape index: {}]
  %s9 = inlined_call_operand.vmem [shape: f32[8,2], index: 9, kind: output, shape index: {}]
  %s10 = sld [smem:[#allocation0]]
  $region50: #{tpu_custom_call.1} parent=0
    _
  %s12 = ssub.s32 1, %s10
  %s13 = scalar_select 0, %s12, %s10
  $region1: #{tpu_custom_call.1} parent=0
    #allocation2 [shape = 'u8[4096]{0}', space=vmem, size = 0x1000, scoped, tag = 'input window, operand 0, single buffered']
    #allocation3 [shape = 's32[1]{0}', space=sflag, size = 0x4, scoped, tag = 'scoped memory for tpu_custom_call.1']
    %14 = vsyncpa [#allocation3], 0
    // Predicated region
    $region2: #{tpu_custom_call.1} parent=1 // pred_check
      _
    $region3: #{tpu_custom_call.1} parent=1 // pred_check_branch
      %16 = sbr.rel (0) target = $region5
    $region4: #{tpu_custom_call.1} parent=1 // pred_region
      %s18 = ssub.s32 128, 128
      %19 = vsyncadd [#allocation3], %s18
      %s21 = sshll.u32 [#allocation2], 4
      %s22 = int_to_ptr.vmem [resolvable:$true] %s21
      %24 = dma.hbm_to_vmem [thread:$0]  %s0, 128, %s22, [#allocation3]
    $region5: #{tpu_custom_call.1} parent=1 // pred_fallthru
      _
    // Predicated region
    $region6: #{tpu_custom_call.1} parent=1 // pred_check
      _
    $region7: #{tpu_custom_call.1} parent=1 // pred_check_branch
      %26 = sbr.rel (0) target = $region9
    $region8: #{tpu_custom_call.1} parent=1 // pred_region
      _
    $region9: #{tpu_custom_call.1} parent=1 // pred_fallthru
      _
    // Predicated region
    $region10: #{tpu_custom_call.1} parent=1 // pred_check
      _
    $region11: #{tpu_custom_call.1} parent=1 // pred_check_branch
      %28 = sbr.rel (0) target = $region13
    $region12: #{tpu_custom_call.1} parent=1 // pred_region
      _
    $region13: #{tpu_custom_call.1} parent=1 // pred_fallthru
      _
    // Predicated region
    $region14: #{tpu_custom_call.1} parent=1 // pred_check
      _
    $region15: #{tpu_custom_call.1} parent=1 // pred_check_branch
      %30 = sbr.rel (0) target = $region17
    $region16: #{tpu_custom_call.1} parent=1 // pred_region
      _
    $region17: #{tpu_custom_call.1} parent=1 // pred_fallthru
      _
    // Predicated region
    $region18: #{tpu_custom_call.1} parent=1 // pred_check
      _
    $region19: #{tpu_custom_call.1} parent=1 // pred_check_branch
      %32 = sbr.rel (0) target = $region21
    $region20: #{tpu_custom_call.1} parent=1 // pred_region
      _
    $region21: #{tpu_custom_call.1} parent=1 // pred_fallthru
      _
    // Predicated region
    $region22: #{tpu_custom_call.1} parent=1 // pred_check
      _
    $region23: #{tpu_custom_call.1} parent=1 // pred_check_branch
      %34 = sbr.rel (0) target = $region25
    $region24: #{tpu_custom_call.1} parent=1 // pred_region
      _
    $region25: #{tpu_custom_call.1} parent=1 // pred_fallthru
      _
    // Predicated region
    $region26: #{tpu_custom_call.1} parent=1 // pred_check
      _
    $region27: #{tpu_custom_call.1} parent=1 // pred_check_branch
      %36 = sbr.rel (0) target = $region29
    $region28: #{tpu_custom_call.1} parent=1 // pred_region
      _
    $region29: #{tpu_custom_call.1} parent=1 // pred_fallthru
      _
    // Predicated region
    $region30: #{tpu_custom_call.1} parent=1 // pred_check
      _
    $region31: #{tpu_custom_call.1} parent=1 // pred_check_branch
      %38 = sbr.rel (0) target = $region33
    $region32: #{tpu_custom_call.1} parent=1 // pred_region
      _
    $region33: #{tpu_custom_call.1} parent=1 // pred_fallthru
      _
    // Predicated region
    $region34: #{tpu_custom_call.1} parent=1 // pred_check
      _
    $region35: #{tpu_custom_call.1} parent=1 // pred_check_branch
      %40 = sbr.rel (0) target = $region37
    $region36: #{tpu_custom_call.1} parent=1 // pred_region
      _
    $region37: #{tpu_custom_call.1} parent=1 // pred_fallthru
      _
    // Predicated region
    $region38: #{tpu_custom_call.1} parent=1 // pred_check
      _
    $region39: #{tpu_custom_call.1} parent=1 // pred_check_branch
      %42 = sbr.rel (0) target = $region41
    $region40: #{tpu_custom_call.1} parent=1 // pred_region
      %43 = dma.done [#allocation3], 128
    $region41: #{tpu_custom_call.1} parent=1 // pred_fallthru
      _
    %v44 = vld [vmem:[#allocation2] sm:$0xff]
    %v45 = vld [vmem:[%s2] sm:$0xff]
    %v46 = vld [vmem:[%s2 + $0x8] sm:$0xf]
    %v47 = vld [vmem:[%s1] sm:$0xff]
    %v48 = vld [vmem:[%s3] sm:$0xf]
    %vm49 = vcmask 31744
    %v51 = vsel %vm49, %v47, 0
    %vm53 = vcmask 1043456
    %v55 = vsel %vm53, %v48, 0
    %57 = vmatprep.subr.mxu0 0.0
    %58 = vmatpush1.msra.mxu0 0.0
    %59 = vmatprep.subr.mxu0 0.0
    %60 = vmatpush1.msra.mxu0 0.0
    %61 = vmatprep.subr.mxu0 0.0
    %62 = vmatpush1.msra.mxu0 0.0
    %63 = vmatprep.subr.mxu0 0.0
    %64 = vmatpush1.msra.mxu0 0.0
    %65 = vmatprep.subr.mxu0 0.0
    %66 = vmatpush1.msra.mxu0 0.0
    %67 = vmatprep.subr.mxu0 0.0
    %68 = vmatpush1.msra.mxu0 0.0
    %69 = vmatprep.subr.mxu0 0.0
    %70 = vmatpush1.msra.mxu0 0.0
    %71 = vmatprep.subr.mxu0 0.0
    %72 = vmatpush1.msra.mxu0 0.0
    %73 = vmatprep.subr.mxu0 0.0
    %74 = vmatpush1.msra.mxu0 0.0
    %75 = vmatprep.subr.mxu0 0.0
    %76 = vmatpush1.msra.mxu0 0.0
    %77 = vmatprep.subr.mxu0 0.0
    %78 = vmatpush1.msra.mxu0 0.0
    %79 = vmatprep.subr.mxu0 0.0
    %80 = vmatpush1.msra.mxu0 0.0
    %81 = vmatprep.subr.mxu0 0.0
    %82 = vmatpush1.msra.mxu0 0.0
    %83 = vmatprep.subr.mxu0 0.0
    %84 = vmatpush1.msra.mxu0 0.0
    %85 = vmatprep.subr.mxu0 0.0
    %86 = vmatpush1.msra.mxu0 0.0
    %87 = vmatprep.subr.mxu0 0.0
    %88 = vmatpush1.msra.mxu0 %v55
    %89 = vmatprep.subr.mxu0 0.0
    %90 = vmatpush2.msra.mxu0 0.0
    %91 = vmatprep.subr.mxu0 0.0
    %92 = vmatpush2.msra.mxu0 0.0
    %93 = vmatprep.subr.mxu0 0.0
    %94 = vmatpush2.msra.mxu0 0.0
    %95 = vmatprep.subr.mxu0 0.0
    %96 = vmatpush2.msra.mxu0 0.0
    %97 = vmatprep.subr.mxu0 0.0
    %98 = vmatpush2.msra.mxu0 0.0
    %99 = vmatprep.subr.mxu0 0.0
    %100 = vmatpush2.msra.mxu0 0.0
    %101 = vmatprep.subr.mxu0 0.0
    %102 = vmatpush2.msra.mxu0 0.0
    %103 = vmatprep.subr.mxu0 0.0
    %104 = vmatpush2.msra.mxu0 0.0
    %105 = vmatprep.subr.mxu0 0.0
    %106 = vmatpush2.msra.mxu0 0.0
    %107 = vmatprep.subr.mxu0 0.0
    %108 = vmatpush2.msra.mxu0 0.0
    %109 = vmatprep.subr.mxu0 0.0
    %110 = vmatpush2.msra.mxu0 0.0
    %111 = vmatprep.subr.mxu0 0.0
    %112 = vmatpush2.msra.mxu0 0.0
    %113 = vmatprep.subr.mxu0 0.0
    %114 = vmatpush2.msra.mxu0 0.0
    %115 = vmatprep.subr.mxu0 0.0
    %116 = vmatpush2.msra.mxu0 0.0
    %117 = vmatprep.subr.mxu0 0.0
    %118 = vmatpush2.msra.mxu0 0.0
    %119 = vmatprep.subr.mxu0 0.0
    %120 = vmatpush2.msra.mxu0 0.0
    %121 = vmatprep.mubr.f32.mxu0 0.0
    %122 = vmatmul.mubr.f32.gmra.mxu0 %v51
    %v123 = vpop.f32.mrf.mxu0
    %v124 = vadd.f32 0.0, %v123
    %v125 = vpop.f32.mrf.mxu0
    %126 = vdwg.mxu0
    %vm127 = vcmask 97280
    %v129 = vsel %vm127, %v44, 0
    %v132 = vsel %vm53, %v46, 0
    %134 = vmatprep.subr.mxu0 0.0
    %135 = vmatpush1.msra.mxu0 0.0
    %136 = vmatprep.subr.mxu0 0.0
    %137 = vmatpush1.msra.mxu0 0.0
    %138 = vmatprep.subr.mxu0 0.0
    %139 = vmatpush1.msra.mxu0 0.0
    %140 = vmatprep.subr.mxu0 0.0
    %141 = vmatpush1.msra.mxu0 0.0
    %142 = vmatprep.subr.mxu0 0.0
    %143 = vmatpush1.msra.mxu0 0.0
    %144 = vmatprep.subr.mxu0 0.0
    %145 = vmatpush1.msra.mxu0 0.0
    %146 = vmatprep.subr.mxu0 0.0
    %147 = vmatpush1.msra.mxu0 0.0
    %148 = vmatprep.subr.mxu0 0.0
    %149 = vmatpush1.msra.mxu0 0.0
    %150 = vmatprep.subr.mxu0 0.0
    %151 = vmatpush1.msra.mxu0 0.0
    %152 = vmatprep.subr.mxu0 0.0
    %153 = vmatpush1.msra.mxu0 0.0
    %154 = vmatprep.subr.mxu0 0.0
    %155 = vmatpush1.msra.mxu0 0.0
    %156 = vmatprep.subr.mxu0 0.0
    %157 = vmatpush1.msra.mxu0 0.0
    %158 = vmatprep.subr.mxu0 0.0
    %159 = vmatpush1.msra.mxu0 0.0
    %160 = vmatprep.subr.mxu0 0.0
    %161 = vmatpush1.msra.mxu0 0.0
    %162 = vmatprep.subr.mxu0 0.0
    %163 = vmatpush1.msra.mxu0 %v132
    %164 = vmatprep.subr.mxu0 0.0
    %165 = vmatpush1.msra.mxu0 %v45
    %166 = vmatprep.subr.mxu0 0.0
    %167 = vmatpush2.msra.mxu0 0.0
    %168 = vmatprep.subr.mxu0 0.0
    %169 = vmatpush2.msra.mxu0 0.0
    %170 = vmatprep.subr.mxu0 0.0
    %171 = vmatpush2.msra.mxu0 0.0
    %172 = vmatprep.subr.mxu0 0.0
    %173 = vmatpush2.msra.mxu0 0.0
    %174 = vmatprep.subr.mxu0 0.0
    %175 = vmatpush2.msra.mxu0 0.0
    %176 = vmatprep.subr.mxu0 0.0
    %177 = vmatpush2.msra.mxu0 0.0
    %178 = vmatprep.subr.mxu0 0.0
    %179 = vmatpush2.msra.mxu0 0.0
    %180 = vmatprep.subr.mxu0 0.0
    %181 = vmatpush2.msra.mxu0 0.0
    %182 = vmatprep.subr.mxu0 0.0
    %183 = vmatpush2.msra.mxu0 0.0
    %184 = vmatprep.subr.mxu0 0.0
    %185 = vmatpush2.msra.mxu0 0.0
    %186 = vmatprep.subr.mxu0 0.0
    %187 = vmatpush2.msra.mxu0 0.0
    %188 = vmatprep.subr.mxu0 0.0
    %189 = vmatpush2.msra.mxu0 0.0
    %190 = vmatprep.subr.mxu0 0.0
    %191 = vmatpush2.msra.mxu0 0.0
    %192 = vmatprep.subr.mxu0 0.0
    %193 = vmatpush2.msra.mxu0 0.0
    %194 = vmatprep.subr.mxu0 0.0
    %195 = vmatpush2.msra.mxu0 0.0
    %196 = vmatprep.subr.mxu0 0.0
    %197 = vmatpush2.msra.mxu0 0.0
    %198 = vmatprep.mubr.f32.mxu0 0.0
    %199 = vmatmul.mubr.f32.gmra.mxu0 %v129
    %v200 = vpop.f32.mrf.mxu0
    %v201 = vadd.f32 %v124, %v200
    %v202 = vpop.f32.mrf.mxu0
    %203 = vdwg.mxu0
    %v204 = vld [vmem:[%s4] sm:$0x1]
    %v206 = vlaneseq
    %v207 = vshrl.u32 %v206, 7
    %v208 = vsub.s32 0, %v207
    %v209 = vrot.slane %v204, %v208
    %v211 = vadd.f32 %v201, %v209
    %v212 = vmax.f32 %v211, 0.0
    %v213 = vld [vmem:[%s5] sm:$0xff]
    %v214 = vld [vmem:[%s5 + $0x8] sm:$0xff]
    %v215 = vld [vmem:[%s5 + $0x10] sm:$0xff]
    %v216 = vld [vmem:[%s5 + $0x18] sm:$0xff]
    %v217 = vld [vmem:[%s5 + $0x20] sm:$0xff]
    %v218 = vld [vmem:[%s5 + $0x28] sm:$0xff]
    %v219 = vld [vmem:[%s5 + $0x30] sm:$0xff]
    %v220 = vld [vmem:[%s5 + $0x38] sm:$0xff]
    %v221 = vld [vmem:[%s6] sm:$0x1]
    %v223 = vlaneseq
    %v224 = vshrl.u32 %v223, 7
    %v225 = vsub.s32 0, %v224
    %v226 = vrot.slane %v221, %v225
    %vm228 = vcmask 523264
    %v230 = vsel %vm228, %v212, 0
    %232 = vmatprep.subr.mxu0 0.0
    %233 = vmatpush1.msra.mxu0 0.0
    %234 = vmatprep.subr.mxu0 0.0
    %235 = vmatpush1.msra.mxu0 0.0
    %236 = vmatprep.subr.mxu0 0.0
    %237 = vmatpush1.msra.mxu0 0.0
    %238 = vmatprep.subr.mxu0 0.0
    %239 = vmatpush1.msra.mxu0 0.0
    %240 = vmatprep.subr.mxu0 0.0
    %241 = vmatpush1.msra.mxu0 0.0
    %242 = vmatprep.subr.mxu0 0.0
    %243 = vmatpush1.msra.mxu0 0.0
    %244 = vmatprep.subr.mxu0 0.0
    %245 = vmatpush1.msra.mxu0 0.0
    %246 = vmatprep.subr.mxu0 0.0
    %247 = vmatpush1.msra.mxu0 0.0
    %248 = vmatprep.subr.mxu0 0.0
    %249 = vmatpush1.msra.mxu0 %v220
    %250 = vmatprep.subr.mxu0 0.0
    %251 = vmatpush1.msra.mxu0 %v219
    %252 = vmatprep.subr.mxu0 0.0
    %253 = vmatpush1.msra.mxu0 %v218
    %254 = vmatprep.subr.mxu0 0.0
    %255 = vmatpush1.msra.mxu0 %v217
    %256 = vmatprep.subr.mxu0 0.0
    %257 = vmatpush1.msra.mxu0 %v216
    %258 = vmatprep.subr.mxu0 0.0
    %259 = vmatpush1.msra.mxu0 %v215
    %260 = vmatprep.subr.mxu0 0.0
    %261 = vmatpush1.msra.mxu0 %v214
    %262 = vmatprep.subr.mxu0 0.0
    %263 = vmatpush1.msra.mxu0 %v213
    %264 = vmatprep.subr.mxu0 0.0
    %265 = vmatpush2.msra.mxu0 0.0
    %266 = vmatprep.subr.mxu0 0.0
    %267 = vmatpush2.msra.mxu0 0.0
    %268 = vmatprep.subr.mxu0 0.0
    %269 = vmatpush2.msra.mxu0 0.0
    %270 = vmatprep.subr.mxu0 0.0
    %271 = vmatpush2.msra.mxu0 0.0
    %272 = vmatprep.subr.mxu0 0.0
    %273 = vmatpush2.msra.mxu0 0.0
    %274 = vmatprep.subr.mxu0 0.0
    %275 = vmatpush2.msra.mxu0 0.0
    %276 = vmatprep.subr.mxu0 0.0
    %277 = vmatpush2.msra.mxu0 0.0
    %278 = vmatprep.subr.mxu0 0.0
    %279 = vmatpush2.msra.mxu0 0.0
    %280 = vmatprep.subr.mxu0 0.0
    %281 = vmatpush2.msra.mxu0 0.0
    %282 = vmatprep.subr.mxu0 0.0
    %283 = vmatpush2.msra.mxu0 0.0
    %284 = vmatprep.subr.mxu0 0.0
    %285 = vmatpush2.msra.mxu0 0.0
    %286 = vmatprep.subr.mxu0 0.0
    %287 = vmatpush2.msra.mxu0 0.0
    %288 = vmatprep.subr.mxu0 0.0
    %289 = vmatpush2.msra.mxu0 0.0
    %290 = vmatprep.subr.mxu0 0.0
    %291 = vmatpush2.msra.mxu0 0.0
    %292 = vmatprep.subr.mxu0 0.0
    %293 = vmatpush2.msra.mxu0 0.0
    %294 = vmatprep.subr.mxu0 0.0
    %295 = vmatpush2.msra.mxu0 0.0
    %296 = vmatprep.mubr.f32.mxu0 0.0
    %297 = vmatmul.mubr.f32.gmra.mxu0 %v230
    %v298 = vpop.f32.mrf.mxu0
    %v299 = vadd.f32 %v226, %v298
    %v300 = vpop.f32.mrf.mxu0
    %301 = vdwg.mxu0
    %v302 = vmax.f32 %v299, 0.0
    %v303 = vld [vmem:[%s7] sm:$0xff]
    %v304 = vld [vmem:[%s7 + $0x8] sm:$0xff]
    %v305 = vld [vmem:[%s7 + $0x10] sm:$0xff]
    %v306 = vld [vmem:[%s7 + $0x18] sm:$0xff]
    %v307 = vld [vmem:[%s7 + $0x20] sm:$0xff]
    %v308 = vld [vmem:[%s7 + $0x28] sm:$0xff]
    %v309 = vld [vmem:[%s7 + $0x30] sm:$0xff]
    %v310 = vld [vmem:[%s7 + $0x38] sm:$0xff]
    %v311 = vld [vmem:[%s8] sm:$0x1]
    %v313 = vlaneseq
    %v314 = vshrl.u32 %v313, 7
    %v315 = vsub.s32 0, %v314
    %v316 = vrot.slane %v311, %v315
    %v319 = vsel %vm228, %v302, 0
    %321 = vmatprep.subr.mxu0 0.0
    %322 = vmatpush1.msra.mxu0 0.0
    %323 = vmatprep.subr.mxu0 0.0
    %324 = vmatpush1.msra.mxu0 0.0
    %325 = vmatprep.subr.mxu0 0.0
    %326 = vmatpush1.msra.mxu0 0.0
    %327 = vmatprep.subr.mxu0 0.0
    %328 = vmatpush1.msra.mxu0 0.0
    %329 = vmatprep.subr.mxu0 0.0
    %330 = vmatpush1.msra.mxu0 0.0
    %331 = vmatprep.subr.mxu0 0.0
    %332 = vmatpush1.msra.mxu0 0.0
    %333 = vmatprep.subr.mxu0 0.0
    %334 = vmatpush1.msra.mxu0 0.0
    %335 = vmatprep.subr.mxu0 0.0
    %336 = vmatpush1.msra.mxu0 0.0
    %337 = vmatprep.subr.mxu0 0.0
    %338 = vmatpush1.msra.mxu0 %v310
    %339 = vmatprep.subr.mxu0 0.0
    %340 = vmatpush1.msra.mxu0 %v309
    %341 = vmatprep.subr.mxu0 0.0
    %342 = vmatpush1.msra.mxu0 %v308
    %343 = vmatprep.subr.mxu0 0.0
    %344 = vmatpush1.msra.mxu0 %v307
    %345 = vmatprep.subr.mxu0 0.0
    %346 = vmatpush1.msra.mxu0 %v306
    %347 = vmatprep.subr.mxu0 0.0
    %348 = vmatpush1.msra.mxu0 %v305
    %349 = vmatprep.subr.mxu0 0.0
    %350 = vmatpush1.msra.mxu0 %v304
    %351 = vmatprep.subr.mxu0 0.0
    %352 = vmatpush1.msra.mxu0 %v303
    %353 = vmatprep.subr.mxu0 0.0
    %354 = vmatpush2.msra.mxu0 0.0
    %355 = vmatprep.subr.mxu0 0.0
    %356 = vmatpush2.msra.mxu0 0.0
    %357 = vmatprep.subr.mxu0 0.0
    %358 = vmatpush2.msra.mxu0 0.0
    %359 = vmatprep.subr.mxu0 0.0
    %360 = vmatpush2.msra.mxu0 0.0
    %361 = vmatprep.subr.mxu0 0.0
    %362 = vmatpush2.msra.mxu0 0.0
    %363 = vmatprep.subr.mxu0 0.0
    %364 = vmatpush2.msra.mxu0 0.0
    %365 = vmatprep.subr.mxu0 0.0
    %366 = vmatpush2.msra.mxu0 0.0
    %367 = vmatprep.subr.mxu0 0.0
    %368 = vmatpush2.msra.mxu0 0.0
    %369 = vmatprep.subr.mxu0 0.0
    %370 = vmatpush2.msra.mxu0 0.0
    %371 = vmatprep.subr.mxu0 0.0
    %372 = vmatpush2.msra.mxu0 0.0
    %373 = vmatprep.subr.mxu0 0.0
    %374 = vmatpush2.msra.mxu0 0.0
    %375 = vmatprep.subr.mxu0 0.0
    %376 = vmatpush2.msra.mxu0 0.0
    %377 = vmatprep.subr.mxu0 0.0
    %378 = vmatpush2.msra.mxu0 0.0
    %379 = vmatprep.subr.mxu0 0.0
    %380 = vmatpush2.msra.mxu0 0.0
    %381 = vmatprep.subr.mxu0 0.0
    %382 = vmatpush2.msra.mxu0 0.0
    %383 = vmatprep.subr.mxu0 0.0
    %384 = vmatpush2.msra.mxu0 0.0
    %385 = vmatprep.mubr.f32.mxu0 0.0
    %386 = vmatmul.mubr.f32.gmra.mxu0 %v319
    %v387 = vpop.f32.mrf.mxu0
    %v388 = vadd.f32 %v316, %v387
    %v389 = vpop.f32.mrf.mxu0
    %390 = vdwg.mxu0
    %vm391 = vcmask 15360
    %392 = vst.msk [vmem:[%s9] sm:$0xff] %vm391, %v388
    // Predicated region
    $region42: #{tpu_custom_call.1} parent=1 // pred_check
      _
    $region43: #{tpu_custom_call.1} parent=1 // pred_check_branch
      %394 = sbr.rel (0) target = $region45
    $region44: #{tpu_custom_call.1} parent=1 // pred_region
      _
    $region45: #{tpu_custom_call.1} parent=1 // pred_fallthru
      _
    // Predicated region
    $region46: #{tpu_custom_call.1} parent=1 // pred_check
      _
    $region47: #{tpu_custom_call.1} parent=1 // pred_check_branch
      %396 = sbr.rel (0) target = $region49
    $region48: #{tpu_custom_call.1} parent=1 // pred_region
      _
    $region49: #{tpu_custom_call.1} parent=1 // pred_fallthru
      _
    %397 = vsyncpa [#allocation3], 1

</llo_original>
